<compile_context>
chip_gen: v7x
topology: tpu7x:2x2x1
jax: 0.10.0
libtpu: 0.0.40
codegen_flags: <defaults>
</compile_context>

<pallas_src>
import jax
import jax.numpy as jnp
from jax.experimental import pallas as pl
from jax.experimental.pallas import tpu as pltpu

D = 32  # hidden size (the module's `D` global)


def _fast_recip(x):
    """1/x via the EUP approximate reciprocal + one Newton step (~f32 exact)."""
    r = pl.reciprocal(x, approx=True)
    return r * (2.0 - x * r)


def cq_attention_kernel(c_ref, q_ref, w_ref, qmask_ref, out_ref):
    Cin = c_ref[...]                            # (Bb, D, Lc)  input dtype
    Qin = q_ref[...]                            # (Bb, D, Lq)
    wc = w_ref[...]                             # (D, 3) columns = [w_C, w_Q, w_CQ]
    qmask = qmask_ref[...]                      # (Bb, 1, Lq)

    Dd = Cin.shape[1]
    f32 = jnp.float32
    in_dt = Cin.dtype

    w1 = wc[:, 0:1].astype(in_dt)[None]         # (1, D, 1) multiplies C
    w2 = wc[:, 1:2].astype(in_dt)[None]         # (1, D, 1) multiplies Q
    w3 = wc[:, 2:3].astype(in_dt)[None]         # (1, D, 1) multiplies C*Q

    # ---- trilinear similarity in ONE MXU matmul (augmented K = 3*D) --------
    #   S[b,i,j] = sum_d (C*w3)[d,i] Q[d,j] + sum_d (C*w1)[d,i]*1 + sum_d 1*(Q*w2)[d,j]
    lhs = jnp.concatenate([Cin * w3, Cin * w1, jnp.ones_like(Cin)], axis=1)   # (Bb, 3D, Lc)
    rhs = jnp.concatenate([Qin, jnp.ones_like(Qin), Qin * w2], axis=1)        # (Bb, 3D, Lq)
    S = jnp.einsum('bdi,bdj->bij', lhs, rhs,
                   preferred_element_type=f32)                                # (Bb, Lc, Lq)

    # ---- S1: masked softmax over the query axis (lane reduction) -----------
    neg = jnp.asarray(-1e30, f32)
    masked = jnp.where(qmask > 0, S, neg)
    m1 = jnp.max(masked, axis=2, keepdims=True)
    e1 = jnp.exp(masked - m1)
    S1 = e1 * _fast_recip(jnp.sum(e1, axis=2, keepdims=True))                 # (Bb, Lc, Lq)

    # ---- S2: softmax over the context axis, kept UNnormalised; the column
    #      sums are folded in after the C @ E2 matmul --------------------------
    m2 = jnp.max(S, axis=1, keepdims=True)
    e2 = jnp.exp(S - m2)                                                      # (Bb, Lc, Lq)
    l2 = jnp.sum(e2, axis=1, keepdims=True)                                   # (Bb, 1, Lq)

    S1m = S1.astype(in_dt)   # feed native-dtype operands to the MXU (f32 acc)
    # A^T = Q @ S1^T                        -> (Bb, D, Lc)
    A = jnp.einsum('bdj,bij->bdi', Qin, S1m, preferred_element_type=f32)
    # U^T = C @ E2, normalised afterwards   -> (Bb, D, Lq)
    U = jnp.einsum('bdi,bij->bdj', Cin, e2.astype(in_dt),
                   preferred_element_type=f32) * _fast_recip(l2)
    # B^T = U^T @ S1^T  (reassociated form) -> (Bb, D, Lc)
    Bm = jnp.einsum('bdj,bij->bdi', U.astype(in_dt), S1m,
                    preferred_element_type=f32)

    # ---- output: four D-row bands, each a full-lane store ------------------
    Cf = Cin.astype(f32)
    out_dt = out_ref.dtype
    out_ref[:, 0 * Dd:1 * Dd, :] = Cin.astype(out_dt)
    out_ref[:, 1 * Dd:2 * Dd, :] = A.astype(out_dt)
    out_ref[:, 2 * Dd:3 * Dd, :] = (Cf * A).astype(out_dt)
    out_ref[:, 3 * Dd:4 * Dd, :] = (Cf * Bm).astype(out_dt)


def _pick_batch_block(B, Dd, Lc, Lq, itemsize):
    """Largest divisor of B whose block fits a conservative VMEM budget and
    keeps at least 2 grid steps (v7x has 2 TensorCores per chip)."""
    io_bytes = itemsize * (Dd * Lc + Dd * Lq + Lq + 4 * Dd * Lc) * 2   # double-buffered I/O
    tmp_bytes = 4 * (4 * Lc * Lq + 4 * Dd * Lc + 3 * Dd * Lq)          # f32 intermediates
    per_b = max(io_bytes + tmp_bytes, 1)
    budget = 8 * 1024 * 1024   # well under v5e(16MiB)/v6e(32MiB)/v7x(32MiB) scoped defaults
    cap = max(1, budget // per_b)
    cap = min(cap, max(1, B // 2)) if B > 1 else 1
    bb = 1
    for d in range(1, B + 1):
        if B % d == 0 and d <= cap:
            bb = d
    return bb


def cq_attention(C, Q, qmask, w):
    """C:(B,D,Lc), Q:(B,D,Lq), qmask:(B,Lq), w:(3*D,) -> (B, 4*D, Lc)."""
    B, Dd, Lc = C.shape
    _, _, Lq = Q.shape
    qm = qmask.reshape(B, 1, Lq).astype(C.dtype)                 # (B, 1, Lq)
    wcols = jnp.transpose(w.reshape(3, Dd), (1, 0))              # (D, 3): [w_C, w_Q, w_CQ]
    Bb = _pick_batch_block(B, Dd, Lc, Lq, C.dtype.itemsize)

    return pl.pallas_call(
        cq_attention_kernel,
        out_shape=jax.ShapeDtypeStruct((B, 4 * Dd, Lc), C.dtype),
        grid_spec=pltpu.PrefetchScalarGridSpec(
            num_scalar_prefetch=0,
            grid=(B // Bb,),
            in_specs=[
                pl.BlockSpec((Bb, Dd, Lc), lambda b: (b, 0, 0)),   # C (channel-first)
                pl.BlockSpec((Bb, Dd, Lq), lambda b: (b, 0, 0)),   # Q (channel-first)
                pl.BlockSpec((Dd, 3), lambda b: (0, 0)),           # w columns
                pl.BlockSpec((Bb, 1, Lq), lambda b: (b, 0, 0)),    # qmask
            ],
            out_specs=pl.BlockSpec((Bb, 4 * Dd, Lc), lambda b: (b, 0, 0)),
        ),
        compiler_params=pltpu.CompilerParams(
            dimension_semantics=("parallel",)),
    )(C, Q, wcols, qm)


def cq_attention_ref(C_ncw, Q_ncw, qmask, w):
    """Pure-JAX reference mirroring the PyTorch forward (eval mode)."""
    C = jnp.transpose(C_ncw, (0, 2, 1))  # (B, Lc, D)
    Q = jnp.transpose(Q_ncw, (0, 2, 1))  # (B, Lq, D)
    qm = qmask[:, None, :]               # (B, 1, Lq)
    Ct = C[:, :, None, :]                # (B, Lc, 1, D)
    Qt = Q[:, None, :, :]                # (B, 1, Lq, D)
    S = (Ct * w[:D]).sum(-1) + (Qt * w[D:2 * D]).sum(-1) + (Ct * Qt * w[2 * D:]).sum(-1)
    S1 = jax.nn.softmax(S * qm + (1 - qm) * (-1e30), axis=2)
    S2 = jax.nn.softmax(S, axis=1)
    A = jnp.einsum('blq,bqd->bld', S1, Q)
    Bm = jnp.einsum('blm,bmd->bld', jnp.einsum('blq,bmq->blm', S1, S2), C)
    out = jnp.concatenate([C, A, C * A, C * Bm], axis=2)
    return jnp.transpose(out, (0, 2, 1))


if __name__ == "__main__":
    key = jax.random.PRNGKey(0)
    kC, kQ, kw = jax.random.split(key, 3)
    B, Lc, Lq = 2, 16, 8

    C = jax.random.normal(kC, (B, D, Lc), dtype=jnp.float32)
    Q = jax.random.normal(kQ, (B, D, Lq), dtype=jnp.float32)
    lim = (1.0 / D) ** 0.5
    w = jax.random.uniform(kw, (3 * D,), minval=-lim, maxval=lim, dtype=jnp.float32)
    # qmask: 1 = valid query position, 0 = padding
    qlens = jnp.array([Lq, Lq - 3])
    qmask = (jnp.arange(Lq)[None, :] < qlens[:, None]).astype(jnp.float32)

    out = jax.block_until_ready(cq_attention(C, Q, qmask, w))
    ref = jax.block_until_ready(cq_attention_ref(C, Q, qmask, w))

    assert out.shape == (B, 4 * D, Lc), out.shape
    # tolerance covers the (algebraically exact) reassociation and the
    # EUP-reciprocal(+Newton) softmax normalisation.
    assert jnp.allclose(out, ref, atol=1e-3, rtol=1e-3), \
        float(jnp.max(jnp.abs(out - ref)))
    print("KERNEL_OK")
</pallas_src>

<mosaic_0001>
module attributes {stable_mosaic.version = 11 : i64} {
  func.func @cq_attention_kernel(%arg0: i32, %arg1: memref<1x32x16xf32, #tpu.memory_space<vmem>>, %arg2: memref<1x32x8xf32, #tpu.memory_space<vmem>>, %arg3: memref<32x3xf32, #tpu.memory_space<vmem>>, %arg4: memref<1x1x8xf32, #tpu.memory_space<vmem>>, %arg5: memref<1x128x16xf32, #tpu.memory_space<vmem>>) attributes {dimension_semantics = [#tpu.dimension_semantics<parallel>], iteration_bounds = array<i64: 2>, scalar_prefetch = 0 : i64, scratch_operands = 0 : i64, tpu.core_type = #tpu.core_type<tc>, window_params = [{transform_indices = @transform_0, window_bounds = array<i64: 1, 32, 16>}, {transform_indices = @transform_1, window_bounds = array<i64: 1, 32, 8>}, {pipeline_mode = #tpu.pipeline_mode<synchronous>, transform_indices = @transform_2, window_bounds = array<i64: 32, 3>}, {transform_indices = @transform_3, window_bounds = array<i64: 1, 1, 8>}, {transform_indices = @transform_4, window_bounds = array<i64: 1, 128, 16>}]} {
    %c0 = arith.constant 0 : index
    %c0_0 = arith.constant 0 : index
    %c0_1 = arith.constant 0 : index
    %0 = vector.load %arg1[%c0, %c0_0, %c0_1] : memref<1x32x16xf32, #tpu.memory_space<vmem>>, vector<1x32x16xf32>
    %c0_2 = arith.constant 0 : index
    %c0_3 = arith.constant 0 : index
    %c0_4 = arith.constant 0 : index
    %1 = vector.load %arg2[%c0_2, %c0_3, %c0_4] : memref<1x32x8xf32, #tpu.memory_space<vmem>>, vector<1x32x8xf32>
    %c0_5 = arith.constant 0 : index
    %c0_6 = arith.constant 0 : index
    %2 = vector.load %arg3[%c0_5, %c0_6] : memref<32x3xf32, #tpu.memory_space<vmem>>, vector<32x3xf32>
    %c0_7 = arith.constant 0 : index
    %c0_8 = arith.constant 0 : index
    %c0_9 = arith.constant 0 : index
    %3 = vector.load %arg4[%c0_7, %c0_8, %c0_9] : memref<1x1x8xf32, #tpu.memory_space<vmem>>, vector<1x1x8xf32>
    %4 = vector.extract_strided_slice %2 {offsets = [0, 0], sizes = [32, 1], strides = [1, 1]} : vector<32x3xf32> to vector<32x1xf32>
    %5 = vector.shape_cast %4 : vector<32x1xf32> to vector<1x32x1xf32>
    %6 = vector.extract_strided_slice %2 {offsets = [0, 1], sizes = [32, 1], strides = [1, 1]} : vector<32x3xf32> to vector<32x1xf32>
    %7 = vector.shape_cast %6 : vector<32x1xf32> to vector<1x32x1xf32>
    %8 = vector.extract_strided_slice %2 {offsets = [0, 2], sizes = [32, 1], strides = [1, 1]} : vector<32x3xf32> to vector<32x1xf32>
    %9 = vector.shape_cast %8 : vector<32x1xf32> to vector<1x32x1xf32>
    %10 = vector.broadcast %9 : vector<1x32x1xf32> to vector<1x32x16xf32>
    %11 = arith.mulf %0, %10 : vector<1x32x16xf32>
    %12 = vector.broadcast %5 : vector<1x32x1xf32> to vector<1x32x16xf32>
    %13 = arith.mulf %0, %12 : vector<1x32x16xf32>
    %cst = arith.constant 1.000000e+00 : f32
    %14 = vector.broadcast %cst : f32 to vector<1x32x16xf32>
    %15 = tpu.concatenate %11, %13, %14 in 1 : vector<1x32x16xf32>, vector<1x32x16xf32>, vector<1x32x16xf32> -> vector<1x96x16xf32>
    %cst_10 = arith.constant 1.000000e+00 : f32
    %16 = vector.broadcast %cst_10 : f32 to vector<1x32x8xf32>
    %17 = vector.broadcast %7 : vector<1x32x1xf32> to vector<1x32x8xf32>
    %18 = arith.mulf %1, %17 : vector<1x32x8xf32>
    %19 = tpu.concatenate %1, %16, %18 in 1 : vector<1x32x8xf32>, vector<1x32x8xf32>, vector<1x32x8xf32> -> vector<1x96x8xf32>
    "tpu.trace_start"() <{level = 10 : i32, message = "bdi,bdj->bij"}> : () -> ()
    %cst_11 = arith.constant dense<0.000000e+00> : vector<1x16x8xf32>
    %20 = tpu.matmul %15, %19, %cst_11 {dimension_numbers = #tpu.dot_dimension_numbers<[1], [1], [2], [2], [0, 0, 0, 2, 1, 2], [0], [0]>} : vector<1x96x16xf32>, vector<1x96x8xf32>, vector<1x16x8xf32> -> vector<1x16x8xf32>
    %cst_12 = arith.constant 0.000000e+00 : f32
    "tpu.trace_stop"() : () -> ()
    %21 = vector.broadcast %cst_12 : f32 to vector<1x1x8xf32>
    %22 = arith.cmpf ogt, %3, %21 : vector<1x1x8xf32>
    %cst_13 = arith.constant -1.000000e+30 : f32
    %23 = vector.shape_cast %22 : vector<1x1x8xi1> to vector<1x1x8xi1>
    %24 = vector.broadcast %23 : vector<1x1x8xi1> to vector<1x16x8xi1>
    %25 = vector.broadcast %cst_13 : f32 to vector<1x16x8xf32>
    %26 = arith.select %24, %20, %25 : vector<1x16x8xi1>, vector<1x16x8xf32>
    %cst_14 = arith.constant dense<0xFF800000> : vector<1x16xf32>
    %27 = vector.multi_reduction <maximumf>, %26, %cst_14 [2] : vector<1x16x8xf32> to vector<1x16xf32>
    %28 = vector.shape_cast %27 : vector<1x16xf32> to vector<1x16x1xf32>
    %29 = vector.broadcast %28 : vector<1x16x1xf32> to vector<1x16x8xf32>
    %30 = arith.subf %26, %29 : vector<1x16x8xf32>
    %31 = math.exp %30 : vector<1x16x8xf32>
    %cst_15 = arith.constant dense<0.000000e+00> : vector<1x16xf32>
    %32 = vector.multi_reduction <add>, %31, %cst_15 [2] : vector<1x16x8xf32> to vector<1x16xf32>
    %33 = vector.shape_cast %32 : vector<1x16xf32> to vector<1x16x1xf32>
    %34 = tpu.reciprocal %33 {approx = true} : vector<1x16x1xf32> -> vector<1x16x1xf32>
    %35 = arith.mulf %33, %34 : vector<1x16x1xf32>
    %cst_16 = arith.constant 2.000000e+00 : f32
    %36 = vector.broadcast %cst_16 : f32 to vector<1x16x1xf32>
    %37 = arith.subf %36, %35 : vector<1x16x1xf32>
    %38 = arith.mulf %34, %37 : vector<1x16x1xf32>
    %39 = vector.broadcast %38 : vector<1x16x1xf32> to vector<1x16x8xf32>
    %40 = arith.mulf %31, %39 : vector<1x16x8xf32>
    %cst_17 = arith.constant dense<0xFF800000> : vector<1x8xf32>
    %41 = vector.multi_reduction <maximumf>, %20, %cst_17 [1] : vector<1x16x8xf32> to vector<1x8xf32>
    %42 = vector.shape_cast %41 : vector<1x8xf32> to vector<1x1x8xf32>
    %43 = vector.broadcast %42 : vector<1x1x8xf32> to vector<1x16x8xf32>
    %44 = arith.subf %20, %43 : vector<1x16x8xf32>
    %45 = math.exp %44 : vector<1x16x8xf32>
    %cst_18 = arith.constant dense<0.000000e+00> : vector<1x8xf32>
    %46 = vector.multi_reduction <add>, %45, %cst_18 [1] : vector<1x16x8xf32> to vector<1x8xf32>
    %47 = vector.shape_cast %46 : vector<1x8xf32> to vector<1x1x8xf32>
    "tpu.trace_start"() <{level = 10 : i32, message = "bdj,bij->bdi"}> : () -> ()
    %cst_19 = arith.constant dense<0.000000e+00> : vector<1x32x16xf32>
    %48 = tpu.matmul %1, %40, %cst_19 {dimension_numbers = #tpu.dot_dimension_numbers<[2], [2], [1], [1], [0, 0, 0, 1, 1, 1], [0], [0]>} : vector<1x32x8xf32>, vector<1x16x8xf32>, vector<1x32x16xf32> -> vector<1x32x16xf32>
    "tpu.trace_stop"() : () -> ()
    "tpu.trace_start"() <{level = 10 : i32, message = "bdi,bij->bdj"}> : () -> ()
    %cst_20 = arith.constant dense<0.000000e+00> : vector<1x32x8xf32>
    %49 = tpu.matmul %0, %45, %cst_20 {dimension_numbers = #tpu.dot_dimension_numbers<[2], [1], [1], [2], [0, 0, 0, 1, 1, 2], [0], [0]>} : vector<1x32x16xf32>, vector<1x16x8xf32>, vector<1x32x8xf32> -> vector<1x32x8xf32>
    "tpu.trace_stop"() : () -> ()
    %50 = tpu.reciprocal %47 {approx = true} : vector<1x1x8xf32> -> vector<1x1x8xf32>
    %51 = arith.mulf %47, %50 : vector<1x1x8xf32>
    %cst_21 = arith.constant 2.000000e+00 : f32
    %52 = vector.broadcast %cst_21 : f32 to vector<1x1x8xf32>
    %53 = arith.subf %52, %51 : vector<1x1x8xf32>
    %54 = arith.mulf %50, %53 : vector<1x1x8xf32>
    %55 = vector.broadcast %54 : vector<1x1x8xf32> to vector<1x32x8xf32>
    %56 = arith.mulf %49, %55 : vector<1x32x8xf32>
    "tpu.trace_start"() <{level = 10 : i32, message = "bdj,bij->bdi"}> : () -> ()
    %cst_22 = arith.constant dense<0.000000e+00> : vector<1x32x16xf32>
    %57 = tpu.matmul %56, %40, %cst_22 {dimension_numbers = #tpu.dot_dimension_numbers<[2], [2], [1], [1], [0, 0, 0, 1, 1, 1], [0], [0]>} : vector<1x32x8xf32>, vector<1x16x8xf32>, vector<1x32x16xf32> -> vector<1x32x16xf32>
    "tpu.trace_stop"() : () -> ()
    %c0_23 = arith.constant 0 : index
    %c0_24 = arith.constant 0 : index
    %c0_25 = arith.constant 0 : index
    %58 = vector.load %arg5[%c0_23, %c0_24, %c0_25] : memref<1x128x16xf32, #tpu.memory_space<vmem>>, vector<1x32x16xf32>
    tpu.vector_store %arg5[%c0_23, %c0_24, %c0_25], %0 {strides = array<i32>} : memref<1x128x16xf32, #tpu.memory_space<vmem>>, vector<1x32x16xf32>,
    %c0_26 = arith.constant 0 : index
    %c32 = arith.constant 32 : index
    %c0_27 = arith.constant 0 : index
    %59 = vector.load %arg5[%c0_26, %c32, %c0_27] : memref<1x128x16xf32, #tpu.memory_space<vmem>>, vector<1x32x16xf32>
    tpu.vector_store %arg5[%c0_26, %c32, %c0_27], %48 {strides = array<i32>} : memref<1x128x16xf32, #tpu.memory_space<vmem>>, vector<1x32x16xf32>,
    %60 = arith.mulf %0, %48 : vector<1x32x16xf32>
    %c0_28 = arith.constant 0 : index
    %c64 = arith.constant 64 : index
    %c0_29 = arith.constant 0 : index
    %61 = vector.load %arg5[%c0_28, %c64, %c0_29] : memref<1x128x16xf32, #tpu.memory_space<vmem>>, vector<1x32x16xf32>
    tpu.vector_store %arg5[%c0_28, %c64, %c0_29], %60 {strides = array<i32>} : memref<1x128x16xf32, #tpu.memory_space<vmem>>, vector<1x32x16xf32>,
    %62 = arith.mulf %0, %57 : vector<1x32x16xf32>
    %c0_30 = arith.constant 0 : index
    %c96 = arith.constant 96 : index
    %c0_31 = arith.constant 0 : index
    %63 = vector.load %arg5[%c0_30, %c96, %c0_31] : memref<1x128x16xf32, #tpu.memory_space<vmem>>, vector<1x32x16xf32>
    tpu.vector_store %arg5[%c0_30, %c96, %c0_31], %62 {strides = array<i32>} : memref<1x128x16xf32, #tpu.memory_space<vmem>>, vector<1x32x16xf32>,
    return
  }
  func.func @transform_0(%arg0: i32) -> (i32, i32, i32) {
    %c0_i32 = arith.constant 0 : i32
    %c0_i32_0 = arith.constant 0 : i32
    %c0_i32_1 = arith.constant 0 : i32
    return %arg0, %c0_i32, %c0_i32_0 : i32, i32, i32
  }
  func.func @transform_1(%arg0: i32) -> (i32, i32, i32) {
    %c0_i32 = arith.constant 0 : i32
    %c0_i32_0 = arith.constant 0 : i32
    %c0_i32_1 = arith.constant 0 : i32
    return %arg0, %c0_i32, %c0_i32_0 : i32, i32, i32
  }
  func.func @transform_2(%arg0: i32) -> (i32, i32) {
    %c0_i32 = arith.constant 0 : i32
    %c0_i32_0 = arith.constant 0 : i32
    %c0_i32_1 = arith.constant 0 : i32
    return %c0_i32, %c0_i32_0 : i32, i32
  }
  func.func @transform_3(%arg0: i32) -> (i32, i32, i32) {
    %c0_i32 = arith.constant 0 : i32
    %c0_i32_0 = arith.constant 0 : i32
    %c0_i32_1 = arith.constant 0 : i32
    return %arg0, %c0_i32, %c0_i32_0 : i32, i32, i32
  }
  func.func @transform_4(%arg0: i32) -> (i32, i32, i32) {
    %c0_i32 = arith.constant 0 : i32
    %c0_i32_0 = arith.constant 0 : i32
    %c0_i32_1 = arith.constant 0 : i32
    return %arg0, %c0_i32, %c0_i32_0 : i32, i32, i32
  }
}

</mosaic_0001>

<llo_original>
// kernel: tpu_custom_call.1
$region0: #{tpu_custom_call.1}
  #allocation0 [shape = 'u32[]', space=smem, size = 0x4, offset = 0x4, fixed_abs, tag = 'smem constant byte address 0x4 - core index']
  #allocation1 [shape = 'u32[144,128]{1,0:T(1,128)}', space=vmem, size = 0x12000, scoped, tag = 'internal scratch']
  %s0 = inlined_call_operand.vmem [shape: f32[2,32,16], index: 0, kind: input, shape index: {}]
  %s1 = inlined_call_operand.vmem [shape: f32[2,32,8], index: 1, kind: input, shape index: {}]
  %s2 = inlined_call_operand.vmem [shape: f32[32,3], index: 2, kind: input, shape index: {}]
  %s3 = inlined_call_operand.vmem [shape: f32[2,1,8], index: 3, kind: input, shape index: {}]
  %s4 = inlined_call_operand.vmem [shape: f32[2,128,16], index: 4, kind: output, shape index: {}]
  %s5 = sld [smem:[#allocation0]]
  $region49: #{tpu_custom_call.1} parent=0
    _
  %s7 = ssub.s32 1, %s5
  %s8 = scalar_select 0, %s7, %s5
  loop: start=0, step=1, limit=4
  $region2: #{tpu_custom_call.1} parent=0 // loop_pre_header
    _
  $region3: #{tpu_custom_call.1} parent=0 // loop_header
    %s10 = sphi 0, %s14
    %p11 = scmp.ge.s32.totalorder %s10, 4
    %s20 = sphi 0, %s22
    %s23 = sphi 0, %s20
    %s24 = sphi 0, %s23
    %s40 = sphi 0, %s24
    %s46 = sphi 0, %s48
    %s49 = sphi 0, %s46
    %s50 = sphi 0, %s49
    %s66 = sphi 0, %s50
    %s70 = sphi 0, %s70
    %s72 = sphi 0, %s70
    %s73 = sphi 0, %s72
    %s87 = sphi 0, %s73
    %s93 = sphi 0, %s95
    %s96 = sphi 0, %s93
    %s97 = sphi 0, %s96
    %s113 = sphi 0, %s97
    %s119 = sphi 0, %s121
    %s122 = sphi 0, %s119
    %s123 = sphi 0, %s122
    %s139 = sphi 0, %s123
  $region4: #{tpu_custom_call.1} parent=0 // loop_header_branch
    %13 = sbr.rel (%p11) target = $region8
  $region5: #{tpu_custom_call.1} parent=0 // loop_body
    %s15 = ssub.s32 %s10, 1
    %s16 = ssub.s32 %s10, 2
    %s17 = sadd.s32 %s10, 1
    %s18 = ssub.s32 %s10, %s17
    %p19 = scmp.eq.s32.totalorder %s18, 0
    %s21 = sadd.s32 %s20, 1
    %s22 = scalar_select %p19, %s20, %s21
    %p25 = pneg %p19
    %p26 = scmp.eq.s32.totalorder %s10, 1
    %p27 = por %p25, %p26
    %p28 = scmp.ne.s32.totalorder %s20, %s23
    %p29 = scmp.eq.s32.totalorder %s10, 0
    %p30 = por %p28, %p29
    %p31 = scmp.ne.s32.totalorder %s20, %s23
    %p32 = scmp.eq.s32.totalorder %s15, 1
    %p33 = por %p31, %p32
    %p34 = scmp.ne.s32.totalorder %s23, %s24
    %p35 = scmp.eq.s32.totalorder %s15, 0
    %p36 = por %p34, %p35
    %p37 = scmp.ne.s32.totalorder %s23, %s24
    %p38 = scmp.eq.s32.totalorder %s16, 1
    %p39 = por %p37, %p38
    %p41 = scmp.ne.s32.totalorder %s24, %s40
    %p42 = scmp.eq.s32.totalorder %s16, 0
    %p43 = por %p41, %p42
    %s44 = ssub.s32 %s10, %s17
    %p45 = scmp.eq.s32.totalorder %s44, 0
    %s47 = sadd.s32 %s46, 1
    %s48 = scalar_select %p45, %s46, %s47
    %p51 = pneg %p45
    %p52 = scmp.eq.s32.totalorder %s10, 1
    %p53 = por %p51, %p52
    %p54 = scmp.ne.s32.totalorder %s46, %s49
    %p55 = scmp.eq.s32.totalorder %s10, 0
    %p56 = por %p54, %p55
    %p57 = scmp.ne.s32.totalorder %s46, %s49
    %p58 = scmp.eq.s32.totalorder %s15, 1
    %p59 = por %p57, %p58
    %p60 = scmp.ne.s32.totalorder %s49, %s50
    %p61 = scmp.eq.s32.totalorder %s15, 0
    %p62 = por %p60, %p61
    %p63 = scmp.ne.s32.totalorder %s49, %s50
    %p64 = scmp.eq.s32.totalorder %s16, 1
    %p65 = por %p63, %p64
    %p67 = scmp.ne.s32.totalorder %s50, %s66
    %p68 = scmp.eq.s32.totalorder %s16, 0
    %p69 = por %p67, %p68
    %s71 = sadd.s32 %s70, 1
    %p74 = scmp.eq.s32.totalorder %s10, 1
    %p75 = scmp.ne.s32.totalorder %s70, %s72
    %p76 = scmp.eq.s32.totalorder %s10, 0
    %p77 = por %p75, %p76
    %p78 = scmp.ne.s32.totalorder %s70, %s72
    %p79 = scmp.eq.s32.totalorder %s15, 1
    %p80 = por %p78, %p79
    %p81 = scmp.ne.s32.totalorder %s72, %s73
    %p82 = scmp.eq.s32.totalorder %s15, 0
    %p83 = por %p81, %p82
    %p84 = scmp.ne.s32.totalorder %s72, %s73
    %p85 = scmp.eq.s32.totalorder %s16, 1
    %p86 = por %p84, %p85
    %p88 = scmp.ne.s32.totalorder %s73, %s87
    %p89 = scmp.eq.s32.totalorder %s16, 0
    %p90 = por %p88, %p89
    %s91 = ssub.s32 %s10, %s17
    %p92 = scmp.eq.s32.totalorder %s91, 0
    %s94 = sadd.s32 %s93, 1
    %s95 = scalar_select %p92, %s93, %s94
    %p98 = pneg %p92
    %p99 = scmp.eq.s32.totalorder %s10, 1
    %p100 = por %p98, %p99
    %p101 = scmp.ne.s32.totalorder %s93, %s96
    %p102 = scmp.eq.s32.totalorder %s10, 0
    %p103 = por %p101, %p102
    %p104 = scmp.ne.s32.totalorder %s93, %s96
    %p105 = scmp.eq.s32.totalorder %s15, 1
    %p106 = por %p104, %p105
    %p107 = scmp.ne.s32.totalorder %s96, %s97
    %p108 = scmp.eq.s32.totalorder %s15, 0
    %p109 = por %p107, %p108
    %p110 = scmp.ne.s32.totalorder %s96, %s97
    %p111 = scmp.eq.s32.totalorder %s16, 1
    %p112 = por %p110, %p111
    %p114 = scmp.ne.s32.totalorder %s97, %s113
    %p115 = scmp.eq.s32.totalorder %s16, 0
    %p116 = por %p114, %p115
    %s117 = ssub.s32 %s10, %s17
    %p118 = scmp.eq.s32.totalorder %s117, 0
    %s120 = sadd.s32 %s119, 1
    %s121 = scalar_select %p118, %s119, %s120
    %p124 = pneg %p118
    %p125 = scmp.eq.s32.totalorder %s10, 1
    %p126 = por %p124, %p125
    %p127 = scmp.ne.s32.totalorder %s119, %s122
    %p128 = scmp.eq.s32.totalorder %s10, 0
    %p129 = por %p127, %p128
    %p130 = scmp.ne.s32.totalorder %s119, %s122
    %p131 = scmp.eq.s32.totalorder %s15, 1
    %p132 = por %p130, %p131
    %p133 = scmp.ne.s32.totalorder %s122, %s123
    %p134 = scmp.eq.s32.totalorder %s15, 0
    %p135 = por %p133, %p134
    %p136 = scmp.ne.s32.totalorder %s122, %s123
    %p137 = scmp.eq.s32.totalorder %s16, 1
    %p138 = por %p136, %p137
    %p140 = scmp.ne.s32.totalorder %s123, %s139
    %p141 = scmp.eq.s32.totalorder %s16, 0
    %p142 = por %p140, %p141
    %p143 = scmp.le.s32.totalorder 1, %s10
    %p144 = scmp.lt.s32.totalorder %s10, 3
    %p145 = pnand %p143, %p144
    %p146 = pneg %p145
    // Predicated region
    $region9: #{tpu_custom_call.1} parent=5 // pred_check
      _
    $region10: #{tpu_custom_call.1} parent=5 // pred_check_branch
      %148 = sbr.rel (%p145) target = $region12
    $region11: #{tpu_custom_call.1} parent=5 // pred_region
      %s149 = ssub.s32 %s10, 1
      // Predicated region
      $region13: #{tpu_custom_call.1} parent=11 // pred_check
        %p150 = pneg %p83
      $region14: #{tpu_custom_call.1} parent=11 // pred_check_branch
        %152 = sbr.rel (%p150) target = $region16
      $region15: #{tpu_custom_call.1} parent=11 // pred_region
        _
      $region16: #{tpu_custom_call.1} parent=11 // pred_fallthru
        _
    $region12: #{tpu_custom_call.1} parent=5 // pred_fallthru
      _
    %p153 = scmp.lt.s32.totalorder %s10, 2
    // Predicated region
    $region17: #{tpu_custom_call.1} parent=5 // pred_check
      %p154 = pneg %p153
    $region18: #{tpu_custom_call.1} parent=5 // pred_check_branch
      %156 = sbr.rel (%p154) target = $region20
    $region19: #{tpu_custom_call.1} parent=5 // pred_region
      // Predicated region
      $region21: #{tpu_custom_call.1} parent=19 // pred_check
        %p157 = pneg %p30
      $region22: #{tpu_custom_call.1} parent=19 // pred_check_branch
        %159 = sbr.rel (%p157) target = $region24
      $region23: #{tpu_custom_call.1} parent=19 // pred_region
        %p160 = scmp.lt.s32.totalorder %s10, 1
        %s161 = scalar_select %p160, %s10, 1
        %s162 = smul.addr %s161, 4
        %s163 = smul.addr %s162, 8
        %s164 = scalar_lea.vmem %s0, %s163
      $region24: #{tpu_custom_call.1} parent=19 // pred_fallthru
        _
      // Predicated region
      $region25: #{tpu_custom_call.1} parent=19 // pred_check
        %p165 = pneg %p56
      $region26: #{tpu_custom_call.1} parent=19 // pred_check_branch
        %167 = sbr.rel (%p165) target = $region28
      $region27: #{tpu_custom_call.1} parent=19 // pred_region
        %p168 = scmp.lt.s32.totalorder %s10, 1
        %s169 = scalar_select %p168, %s10, 1
        %s170 = smul.addr %s169, 4
        %s171 = smul.addr %s170, 8
        %s172 = scalar_lea.vmem %s1, %s171
      $region28: #{tpu_custom_call.1} parent=19 // pred_fallthru
        _
      // Predicated region
      $region29: #{tpu_custom_call.1} parent=19 // pred_check
        %p173 = pneg %p103
      $region30: #{tpu_custom_call.1} parent=19 // pred_check_branch
        %175 = sbr.rel (%p173) target = $region32
      $region31: #{tpu_custom_call.1} parent=19 // pred_region
        %p176 = scmp.lt.s32.totalorder %s10, 1
        %s177 = scalar_select %p176, %s10, 1
        %s178 = scalar_lea.vmem %s3, %s177
      $region32: #{tpu_custom_call.1} parent=19 // pred_fallthru
        _
    $region20: #{tpu_custom_call.1} parent=5 // pred_fallthru
      _
    %p179 = scmp.le.s32.totalorder 1, %s10
    %p180 = scmp.lt.s32.totalorder %s10, 3
    %p181 = pnand %p179, %p180
    %p182 = pneg %p181
    // Predicated region
    $region33: #{tpu_custom_call.1} parent=5 // pred_check
      _
    $region34: #{tpu_custom_call.1} parent=5 // pred_check_branch
      %184 = sbr.rel (%p181) target = $region36
    $region35: #{tpu_custom_call.1} parent=5 // pred_region
      %s185 = ssub.s32 %s10, 1
      %p186 = scmp.lt.s32.totalorder %s15, 1
      %s187 = scalar_select %p186, %s15, 1
      %s188 = smul.addr %s187, 4
      %s189 = smul.addr %s188, 8
      %s190 = scalar_lea.vmem %s0, %s189
      %p191 = pneg %p36
      %p192 = pneg %p33
      %p193 = scmp.lt.s32.totalorder %s15, 1
      %s194 = scalar_select %p193, %s15, 1
      %s195 = smul.addr %s194, 4
      %s196 = smul.addr %s195, 8
      %s197 = scalar_lea.vmem %s1, %s196
      %p198 = pneg %p62
      %p199 = pneg %p59
      %p200 = pneg %p83
      %p201 = pneg %p80
      %p202 = scmp.lt.s32.totalorder %s15, 1
      %s203 = scalar_select %p202, %s15, 1
      %s204 = scalar_lea.vmem %s3, %s203
      %p205 = pneg %p109
      %p206 = pneg %p106
      %p207 = pneg %p135
      %p208 = pneg %p132
      %p209 = scmp.lt.s32.totalorder %s15, 1
      %s210 = scalar_select %p209, %s15, 1
      %s211 = smul.addr %s210, 16
      %s212 = smul.addr %s211, 8
      %s213 = scalar_lea.vmem %s4, %s212
      %p214 = scmp.lt.s32.totalorder %s15, 1
      %s215 = scalar_select %p214, %s15, 1
      %s216 = smul.addr %s215, 4
      %s217 = smul.addr %s216, 8
      %s218 = scalar_lea.vmem %s0, %s217
      %p219 = scmp.lt.s32.totalorder %s15, 1
      %s220 = scalar_select %p219, %s15, 1
      %s221 = smul.addr %s220, 4
      %s222 = smul.addr %s221, 8
      %s223 = scalar_lea.vmem %s1, %s222
      %p224 = scmp.lt.s32.totalorder %s15, 1
      %s225 = scalar_select %p224, %s15, 1
      %s226 = scalar_lea.vmem %s3, %s225
      %p227 = scmp.lt.s32.totalorder %s15, 1
      %s228 = scalar_select %p227, %s15, 1
      %s229 = smul.addr %s228, 16
      %s230 = smul.addr %s229, 8
      %s231 = scalar_lea.vmem %s4, %s230
      %v232 = vld [vmem:[%s218] sm:$0xff]
      %v233 = vld [vmem:[%s218 + $0x8] sm:$0xff]
      %v234 = vld [vmem:[%s218 + $0x10] sm:$0xff]
      %v235 = vld [vmem:[%s218 + $0x18] sm:$0xff]
      %v236 = vld [vmem:[%s223] sm:$0xff]
      %v237 = vld [vmem:[%s223 + $0x8] sm:$0xff]
      %v238 = vld [vmem:[%s223 + $0x10] sm:$0xff]
      %v239 = vld [vmem:[%s223 + $0x18] sm:$0xff]
      %v240 = vld [vmem:[%s2] sm:$0xff]
      %v241 = vld [vmem:[%s2 + $0x8] sm:$0xff]
      %v242 = vld [vmem:[%s2 + $0x10] sm:$0xff]
      %v243 = vld [vmem:[%s2 + $0x18] sm:$0xff]
      %v244 = vld [vmem:[%s226] sm:$0x1]
      %246 = vset.pattern.permute.xlu0 2
      %247 = vperm.xlu0 %246, %v240
      %v248 = vpop.permute.xlu0 %247
      %251 = vset.pattern.permute.xlu0 2
      %252 = vperm.xlu0 %251, %v241
      %v253 = vpop.permute.xlu0 %252
      %256 = vset.pattern.permute.xlu0 2
      %257 = vperm.xlu0 %256, %v242
      %v258 = vpop.permute.xlu0 %257
      %261 = vset.pattern.permute.xlu0 2
      %262 = vperm.xlu0 %261, %v243
      %v263 = vpop.permute.xlu0 %262
      %v265 = vmul.f32 %v232, %v248
      %v266 = vmul.f32 %v233, %v253
      %v267 = vmul.f32 %v234, %v258
      %v268 = vmul.f32 %v235, %v263
      %269 = vset.pattern.permute.xlu0 0
      %270 = vperm.xlu0 %269, %v240
      %v271 = vpop.permute.xlu0 %270
      %273 = vset.pattern.permute.xlu0 0
      %274 = vperm.xlu0 %273, %v241
      %v275 = vpop.permute.xlu0 %274
      %277 = vset.pattern.permute.xlu0 0
      %278 = vperm.xlu0 %277, %v242
      %v279 = vpop.permute.xlu0 %278
      %281 = vset.pattern.permute.xlu0 0
      %282 = vperm.xlu0 %281, %v243
      %v283 = vpop.permute.xlu0 %282
      %v285 = vmul.f32 %v232, %v271
      %v286 = vmul.f32 %v233, %v275
      %v287 = vmul.f32 %v234, %v279
      %v288 = vmul.f32 %v235, %v283
      %289 = vset.pattern.permute.xlu0 1
      %290 = vperm.xlu0 %289, %v240
      %v291 = vpop.permute.xlu0 %290
      %293 = vset.pattern.permute.xlu0 1
      %294 = vperm.xlu0 %293, %v241
      %v295 = vpop.permute.xlu0 %294
      %297 = vset.pattern.permute.xlu0 1
      %298 = vperm.xlu0 %297, %v242
      %v299 = vpop.permute.xlu0 %298
      %301 = vset.pattern.permute.xlu0 1
      %302 = vperm.xlu0 %301, %v243
      %v303 = vpop.permute.xlu0 %302
      %v305 = vmul.f32 %v236, %v291
      %v306 = vmul.f32 %v237, %v295
      %v307 = vmul.f32 %v238, %v299
      %v308 = vmul.f32 %v239, %v303
      %309 = vxpose.xlu0.b32.start [1/16] %v265, 128
      %310 = vxpose.xlu0.b32.cont [2/16] %v266, 128
      %311 = vxpose.xlu0.b32.cont [3/16] %v267, 128
      %312 = vxpose.xlu0.b32.cont [4/16] %v268, 128
      %313 = vxpose.xlu0.b32.cont [5/16] %v285, 128
      %314 = vxpose.xlu0.b32.cont [6/16] %v286, 128
      %315 = vxpose.xlu0.b32.cont [7/16] %v287, 128
      %316 = vxpose.xlu0.b32.cont [8/16] %v288, 128
      %317 = vxpose.xlu0.b32.cont [9/16] 1.0, 128
      %318 = vxpose.xlu0.b32.cont [10/16] 1.0, 128
      %319 = vxpose.xlu0.b32.cont [11/16] 1.0, 128
      %320 = vxpose.xlu0.b32.cont [12/16] 1.0, 128
      %321 = vxpose.xlu0.b32.cont [13/16] 0.0, 128
      %322 = vxpose.xlu0.b32.cont [14/16] 0.0, 128
      %323 = vxpose.xlu0.b32.cont [15/16] 0.0, 128
      %324 = vxpose.xlu0.b32.end [16/16] 0.0, 128
      %v325 = vpop.trf.xlu0
      %v326 = vpop.trf.xlu0
      %v327 = vpop.trf.xlu0
      %v328 = vpop.trf.xlu0
      %v329 = vpop.trf.xlu0
      %v330 = vpop.trf.xlu0
      %v331 = vpop.trf.xlu0
      %v332 = vpop.trf.xlu0
      %v333 = vpop.trf.xlu0
      %v334 = vpop.trf.xlu0
      %v335 = vpop.trf.xlu0
      %v336 = vpop.trf.xlu0
      %v337 = vpop.trf.xlu0
      %v338 = vpop.trf.xlu0
      %v339 = vpop.trf.xlu0
      %v340 = vpop.trf.xlu0
      %vm341 = vcmask 785408
      %v343 = vsel %vm341, %v325, 0
      %v346 = vsel %vm341, %v326, 0
      %348 = vmatprep.subr.mxu0 0.0
      %349 = vmatpush1.msra.mxu0 %v236
      %350 = vmatprep.subr.mxu0 0.0
      %351 = vmatpush1.msra.mxu0 %v237
      %352 = vmatprep.subr.mxu0 0.0
      %353 = vmatpush1.msra.mxu0 %v238
      %354 = vmatprep.subr.mxu0 0.0
      %355 = vmatpush1.msra.mxu0 %v239
      %356 = vmatprep.subr.mxu0 0.0
      %357 = vmatpush1.msra.mxu0 1.0
      %358 = vmatprep.subr.mxu0 0.0
      %359 = vmatpush1.msra.mxu0 1.0
      %360 = vmatprep.subr.mxu0 0.0
      %361 = vmatpush1.msra.mxu0 1.0
      %362 = vmatprep.subr.mxu0 0.0
      %363 = vmatpush1.msra.mxu0 1.0
      %364 = vmatprep.subr.mxu0 0.0
      %365 = vmatpush1.msra.mxu0 %v305
      %366 = vmatprep.subr.mxu0 0.0
      %367 = vmatpush1.msra.mxu0 %v306
      %368 = vmatprep.subr.mxu0 0.0
      %369 = vmatpush1.msra.mxu0 %v307
      %370 = vmatprep.subr.mxu0 0.0
      %371 = vmatpush1.msra.mxu0 %v308
      %372 = vmatprep.subr.mxu0 0.0
      %373 = vmatpush1.msra.mxu0 0.0
      %374 = vmatprep.subr.mxu0 0.0
      %375 = vmatpush1.msra.mxu0 0.0
      %376 = vmatprep.subr.mxu0 0.0
      %377 = vmatpush1.msra.mxu0 0.0
      %378 = vmatprep.subr.mxu0 0.0
      %379 = vmatpush1.msra.mxu0 0.0
      %380 = vmatprep.subr.mxu0 0.0
      %381 = vmatpush1.msra.mxu0 0.0
      %382 = vmatprep.subr.mxu0 0.0
      %383 = vmatpush1.msra.mxu0 0.0
      %384 = vmatprep.subr.mxu0 0.0
      %385 = vmatpush1.msra.mxu0 0.0
      %386 = vmatprep.subr.mxu0 0.0
      %387 = vmatpush1.msra.mxu0 0.0
      %388 = vmatprep.subr.mxu0 0.0
      %389 = vmatpush1.msra.mxu0 0.0
      %390 = vmatprep.subr.mxu0 0.0
      %391 = vmatpush1.msra.mxu0 0.0
      %392 = vmatprep.subr.mxu0 0.0
      %393 = vmatpush1.msra.mxu0 0.0
      %394 = vmatprep.subr.mxu0 0.0
      %395 = vmatpush1.msra.mxu0 0.0
      %396 = vmatprep.subr.mxu0 0.0
      %397 = vmatpush1.msra.mxu0 0.0
      %398 = vmatprep.subr.mxu0 0.0
      %399 = vmatpush1.msra.mxu0 0.0
      %400 = vmatprep.subr.mxu0 0.0
      %401 = vmatpush1.msra.mxu0 0.0
      %402 = vmatprep.subr.mxu0 0.0
      %403 = vmatpush1.msra.mxu0 0.0
      %404 = vmatprep.subr.mxu0 0.0
      %405 = vmatpush1.msra.mxu0 0.0
      %406 = vmatprep.subr.mxu0 0.0
      %407 = vmatpush1.msra.mxu0 0.0
      %408 = vmatprep.subr.mxu0 0.0
      %409 = vmatpush1.msra.mxu0 0.0
      %410 = vmatprep.subr.mxu0 0.0
      %411 = vmatpush1.msra.mxu0 0.0
      %412 = vmatprep.mubr.f32.mxu0 0.0
      %413 = vmatmul.mubr.f32.gmra.mrb[0].mxu0 %v343
      %v414 = vpop.f32.mrb[0].mxu0
      %v415 = vadd.f32 0.0, %v414
      %v416 = vpop.f32.mrb[0].mxu0
      %417 = vmatprep.mubr.f32.mxu0 0.0
      %418 = vmatmul.mubr.f32.gmra.mrb[0].mxu0 %v346
      %v419 = vpop.f32.mrb[0].mxu0
      %v420 = vadd.f32 0.0, %v419
      %v421 = vpop.f32.mrb[0].mxu0
      %422 = vdwg.mxu0
      %vm423 = vcmp.gt.f32.partialorder %v244, 0.0
      %v424 = vsel %vm423, 1, 0
      %v425 = vlaneseq
      %v426 = vshrl.u32 %v425, 7
      %v427 = vsub.s32 0, %v426
      %v428 = vrot.slane %v424, %v427
      %vm429 = vcmp.eq.s32.totalorder %v428, 1
      %v430 = vsel %vm429, %v415, -1e+30
      %v431 = vsel %vm429, %v420, -1e+30
      %vm432 = vcmask 64512
      %v433 = vsel %vm432, %v430, -inf
      %434 = vmax.xlane.f32.xlu0 %v433
      %v435 = vpop.xlane.xlu0 %434
      %v436 = vsel %vm432, %v431, -inf
      %437 = vmax.xlane.f32.xlu0 %v436
      %v438 = vpop.xlane.xlu0 %437
      %v439 = vsub.f32 %v430, %v435
      %v440 = vsub.f32 %v431, %v438
      %v441 = vmul.f32 %v439, 1.442695
      %v442 = vpow.pop %v441
      %v443 = vmul.f32 %v440, 1.442695
      %v444 = vpow.pop %v443
      %v445 = vsel %vm432, %v442, 0.0
      %446 = vadd.xlane.f32.xlu0 %v445
      %v447 = vpop.xlane.xlu0 %446
      %v448 = vsel %vm432, %v444, 0.0
      %449 = vadd.xlane.f32.xlu0 %v448
      %v450 = vpop.xlane.xlu0 %449
      %v451 = vrcp.pop %v447
      %v452 = vrcp.pop %v450
      %v453 = vmul.f32 %v447, %v451
      %v454 = vmul.f32 %v450, %v452
      %v455 = vsub.f32 2.0, %v453
      %v456 = vsub.f32 2.0, %v454
      %v457 = vmul.f32 %v451, %v455
      %v458 = vmul.f32 %v452, %v456
      %v459 = vmul.f32 %v442, %v457
      %v460 = vmul.f32 %v444, %v458
      %v461 = vsel %vm432, %v415, -inf
      %v462 = vsel %vm432, %v420, -inf
      %v463 = vmax.f32 %v461, %v462
      %v464 = vrot.slane %v463, 4
      %v465 = vmax.f32 %v463, %v464
      %v466 = vrot.slane %v465, 2
      %v467 = vmax.f32 %v465, %v466
      %v468 = vrot.slane %v467, 1
      %v469 = vmax.f32 %v467, %v468
      %v470 = vsub.f32 %v415, %v469
      %v471 = vsub.f32 %v420, %v469
      %v472 = vmul.f32 %v470, 1.442695
      %v473 = vpow.pop %v472
      %v474 = vmul.f32 %v471, 1.442695
      %v475 = vpow.pop %v474
      %v476 = vsel %vm432, %v473, 0.0
      %v477 = vsel %vm432, %v475, 0.0
      %v478 = vadd.f32 %v476, %v477
      %v479 = vrot.slane %v478, 4
      %v480 = vadd.f32 %v478, %v479
      %v481 = vrot.slane %v480, 2
      %v482 = vadd.f32 %v480, %v481
      %v483 = vrot.slane %v482, 1
      %v484 = vadd.f32 %v482, %v483
      %v486 = vsel %vm432, %v236, 0
      %v489 = vsel %vm432, %v237, 0
      %v492 = vsel %vm432, %v238, 0
      %v495 = vsel %vm432, %v239, 0
      %v498 = vsel %vm432, %v459, 0
      %v501 = vsel %vm432, %v460, 0
      %503 = vmatprep.subr.mxu0 0.0
      %504 = vmatpush1.xpose.msra.mxu0 %v498
      %505 = vmatprep.subr.mxu0 0.0
      %506 = vmatpush1.xpose.msra.mxu0 %v501
      %507 = vmatprep.subr.mxu0 0.0
      %508 = vmatpush1.xpose.msra.mxu0 0.0
      %509 = vmatprep.subr.mxu0 0.0
      %510 = vmatpush1.xpose.msra.mxu0 0.0
      %511 = vmatprep.subr.mxu0 0.0
      %512 = vmatpush1.xpose.msra.mxu0 0.0
      %513 = vmatprep.subr.mxu0 0.0
      %514 = vmatpush1.xpose.msra.mxu0 0.0
      %515 = vmatprep.subr.mxu0 0.0
      %516 = vmatpush1.xpose.msra.mxu0 0.0
      %517 = vmatprep.subr.mxu0 0.0
      %518 = vmatpush1.xpose.msra.mxu0 0.0
      %519 = vmatprep.subr.mxu0 0.0
      %520 = vmatpush1.xpose.msra.mxu0 0.0
      %521 = vmatprep.subr.mxu0 0.0
      %522 = vmatpush1.xpose.msra.mxu0 0.0
      %523 = vmatprep.subr.mxu0 0.0
      %524 = vmatpush1.xpose.msra.mxu0 0.0
      %525 = vmatprep.subr.mxu0 0.0
      %526 = vmatpush1.xpose.msra.mxu0 0.0
      %527 = vmatprep.subr.mxu0 0.0
      %528 = vmatpush1.xpose.msra.mxu0 0.0
      %529 = vmatprep.subr.mxu0 0.0
      %530 = vmatpush1.xpose.msra.mxu0 0.0
      %531 = vmatprep.subr.mxu0 0.0
      %532 = vmatpush1.xpose.msra.mxu0 0.0
      %533 = vmatprep.subr.mxu0 0.0
      %534 = vmatpush1.xpose.msra.mxu0 0.0
      %535 = vmatprep.subr.mxu0 0.0
      %536 = vmatpush1.xpose.msra.mxu0 0.0
      %537 = vmatprep.subr.mxu0 0.0
      %538 = vmatpush1.xpose.msra.mxu0 0.0
      %539 = vmatprep.subr.mxu0 0.0
      %540 = vmatpush1.xpose.msra.mxu0 0.0
      %541 = vmatprep.subr.mxu0 0.0
      %542 = vmatpush1.xpose.msra.mxu0 0.0
      %543 = vmatprep.subr.mxu0 0.0
      %544 = vmatpush1.xpose.msra.mxu0 0.0
      %545 = vmatprep.subr.mxu0 0.0
      %546 = vmatpush1.xpose.msra.mxu0 0.0
      %547 = vmatprep.subr.mxu0 0.0
      %548 = vmatpush1.xpose.msra.mxu0 0.0
      %549 = vmatprep.subr.mxu0 0.0
      %550 = vmatpush1.xpose.msra.mxu0 0.0
      %551 = vmatprep.subr.mxu0 0.0
      %552 = vmatpush1.xpose.msra.mxu0 0.0
      %553 = vmatprep.subr.mxu0 0.0
      %554 = vmatpush1.xpose.msra.mxu0 0.0
      %555 = vmatprep.subr.mxu0 0.0
      %556 = vmatpush1.xpose.msra.mxu0 0.0
      %557 = vmatprep.subr.mxu0 0.0
      %558 = vmatpush1.xpose.msra.mxu0 0.0
      %559 = vmatprep.subr.mxu0 0.0
      %560 = vmatpush1.xpose.msra.mxu0 0.0
      %561 = vmatprep.subr.mxu0 0.0
      %562 = vmatpush1.xpose.msra.mxu0 0.0
      %563 = vmatprep.subr.mxu0 0.0
      %564 = vmatpush1.xpose.msra.mxu0 0.0
      %565 = vmatprep.subr.mxu0 0.0
      %566 = vmatpush1.xpose.msra.mxu0 0.0
      %567 = vmatprep.mubr.f32.mxu0 0.0
      %568 = vmatmul.mubr.f32.gmra.mrb[0].mxu0 %v486
      %v569 = vpop.f32.mrb[0].mxu0
      %v570 = vadd.f32 0.0, %v569
      %v571 = vpop.f32.mrb[0].mxu0
      %572 = vmatprep.mubr.f32.mxu0 0.0
      %573 = vmatmul.mubr.f32.gmra.mrb[0].mxu0 %v489
      %v574 = vpop.f32.mrb[0].mxu0
      %v575 = vadd.f32 0.0, %v574
      %v576 = vpop.f32.mrb[0].mxu0
      %577 = vmatprep.mubr.f32.mxu0 0.0
      %578 = vmatmul.mubr.f32.gmra.mrb[0].mxu0 %v492
      %v579 = vpop.f32.mrb[0].mxu0
      %v580 = vadd.f32 0.0, %v579
      %v581 = vpop.f32.mrb[0].mxu0
      %582 = vmatprep.mubr.f32.mxu0 0.0
      %583 = vmatmul.mubr.f32.gmra.mrb[0].mxu0 %v495
      %v584 = vpop.f32.mrb[0].mxu0
      %v585 = vadd.f32 0.0, %v584
      %v586 = vpop.f32.mrb[0].mxu0
      %587 = vdwg.mxu0
      %vm588 = vcmask 130048
      %v590 = vsel %vm588, %v232, 0
      %v593 = vsel %vm588, %v233, 0
      %v596 = vsel %vm588, %v234, 0
      %v599 = vsel %vm588, %v235, 0
      %601 = vmatprep.subr.mxu0 0.0
      %602 = vmatpush1.msra.mxu0 %v473
      %603 = vmatprep.subr.mxu0 0.0
      %604 = vmatpush1.msra.mxu0 %v475
      %605 = vmatprep.subr.mxu0 0.0
      %606 = vmatpush1.msra.mxu0 0.0
      %607 = vmatprep.subr.mxu0 0.0
      %608 = vmatpush1.msra.mxu0 0.0
      %609 = vmatprep.subr.mxu0 0.0
      %610 = vmatpush1.msra.mxu0 0.0
      %611 = vmatprep.subr.mxu0 0.0
      %612 = vmatpush1.msra.mxu0 0.0
      %613 = vmatprep.subr.mxu0 0.0
      %614 = vmatpush1.msra.mxu0 0.0
      %615 = vmatprep.subr.mxu0 0.0
      %616 = vmatpush1.msra.mxu0 0.0
      %617 = vmatprep.subr.mxu0 0.0
      %618 = vmatpush1.msra.mxu0 0.0
      %619 = vmatprep.subr.mxu0 0.0
      %620 = vmatpush1.msra.mxu0 0.0
      %621 = vmatprep.subr.mxu0 0.0
      %622 = vmatpush1.msra.mxu0 0.0
      %623 = vmatprep.subr.mxu0 0.0
      %624 = vmatpush1.msra.mxu0 0.0
      %625 = vmatprep.subr.mxu0 0.0
      %626 = vmatpush1.msra.mxu0 0.0
      %627 = vmatprep.subr.mxu0 0.0
      %628 = vmatpush1.msra.mxu0 0.0
      %629 = vmatprep.subr.mxu0 0.0
      %630 = vmatpush1.msra.mxu0 0.0
      %631 = vmatprep.subr.mxu0 0.0
      %632 = vmatpush1.msra.mxu0 0.0
      %633 = vmatprep.subr.mxu0 0.0
      %634 = vmatpush1.msra.mxu0 0.0
      %635 = vmatprep.subr.mxu0 0.0
      %636 = vmatpush1.msra.mxu0 0.0
      %637 = vmatprep.subr.mxu0 0.0
      %638 = vmatpush1.msra.mxu0 0.0
      %639 = vmatprep.subr.mxu0 0.0
      %640 = vmatpush1.msra.mxu0 0.0
      %641 = vmatprep.subr.mxu0 0.0
      %642 = vmatpush1.msra.mxu0 0.0
      %643 = vmatprep.subr.mxu0 0.0
      %644 = vmatpush1.msra.mxu0 0.0
      %645 = vmatprep.subr.mxu0 0.0
      %646 = vmatpush1.msra.mxu0 0.0
      %647 = vmatprep.subr.mxu0 0.0
      %648 = vmatpush1.msra.mxu0 0.0
      %649 = vmatprep.subr.mxu0 0.0
      %650 = vmatpush1.msra.mxu0 0.0
      %651 = vmatprep.subr.mxu0 0.0
      %652 = vmatpush1.msra.mxu0 0.0
      %653 = vmatprep.subr.mxu0 0.0
      %654 = vmatpush1.msra.mxu0 0.0
      %655 = vmatprep.subr.mxu0 0.0
      %656 = vmatpush1.msra.mxu0 0.0
      %657 = vmatprep.subr.mxu0 0.0
      %658 = vmatpush1.msra.mxu0 0.0
      %659 = vmatprep.subr.mxu0 0.0
      %660 = vmatpush1.msra.mxu0 0.0
      %661 = vmatprep.subr.mxu0 0.0
      %662 = vmatpush1.msra.mxu0 0.0
      %663 = vmatprep.subr.mxu0 0.0
      %664 = vmatpush1.msra.mxu0 0.0
      %665 = vmatprep.mubr.f32.mxu0 0.0
      %666 = vmatmul.mubr.f32.gmra.mrb[0].mxu0 %v590
      %v667 = vpop.f32.mrb[0].mxu0
      %v668 = vadd.f32 0.0, %v667
      %v669 = vpop.f32.mrb[0].mxu0
      %670 = vmatprep.mubr.f32.mxu0 0.0
      %671 = vmatmul.mubr.f32.gmra.mrb[0].mxu0 %v593
      %v672 = vpop.f32.mrb[0].mxu0
      %v673 = vadd.f32 0.0, %v672
      %v674 = vpop.f32.mrb[0].mxu0
      %675 = vmatprep.mubr.f32.mxu0 0.0
      %676 = vmatmul.mubr.f32.gmra.mrb[0].mxu0 %v596
      %v677 = vpop.f32.mrb[0].mxu0
      %v678 = vadd.f32 0.0, %v677
      %v679 = vpop.f32.mrb[0].mxu0
      %680 = vmatprep.mubr.f32.mxu0 0.0
      %681 = vmatmul.mubr.f32.gmra.mrb[0].mxu0 %v599
      %v682 = vpop.f32.mrb[0].mxu0
      %v683 = vadd.f32 0.0, %v682
      %v684 = vpop.f32.mrb[0].mxu0
      %685 = vdwg.mxu0
      %v686 = vrcp.pop %v484
      %v687 = vmul.f32 %v484, %v686
      %v688 = vsub.f32 2.0, %v687
      %v689 = vmul.f32 %v686, %v688
      %v690 = vmul.f32 %v668, %v689
      %v691 = vmul.f32 %v673, %v689
      %v692 = vmul.f32 %v678, %v689
      %v693 = vmul.f32 %v683, %v689
      %v695 = vsel %vm432, %v690, 0
      %v698 = vsel %vm432, %v691, 0
      %v701 = vsel %vm432, %v692, 0
      %v704 = vsel %vm432, %v693, 0
      %706 = vmatprep.subr.mxu0 0.0
      %707 = vmatpush1.xpose.msra.mxu0 %v498
      %708 = vmatprep.subr.mxu0 0.0
      %709 = vmatpush1.xpose.msra.mxu0 %v501
      %710 = vmatprep.subr.mxu0 0.0
      %711 = vmatpush1.xpose.msra.mxu0 0.0
      %712 = vmatprep.subr.mxu0 0.0
      %713 = vmatpush1.xpose.msra.mxu0 0.0
      %714 = vmatprep.subr.mxu0 0.0
      %715 = vmatpush1.xpose.msra.mxu0 0.0
      %716 = vmatprep.subr.mxu0 0.0
      %717 = vmatpush1.xpose.msra.mxu0 0.0
      %718 = vmatprep.subr.mxu0 0.0
      %719 = vmatpush1.xpose.msra.mxu0 0.0
      %720 = vmatprep.subr.mxu0 0.0
      %721 = vmatpush1.xpose.msra.mxu0 0.0
      %722 = vmatprep.subr.mxu0 0.0
      %723 = vmatpush1.xpose.msra.mxu0 0.0
      %724 = vmatprep.subr.mxu0 0.0
      %725 = vmatpush1.xpose.msra.mxu0 0.0
      %726 = vmatprep.subr.mxu0 0.0
      %727 = vmatpush1.xpose.msra.mxu0 0.0
      %728 = vmatprep.subr.mxu0 0.0
      %729 = vmatpush1.xpose.msra.mxu0 0.0
      %730 = vmatprep.subr.mxu0 0.0
      %731 = vmatpush1.xpose.msra.mxu0 0.0
      %732 = vmatprep.subr.mxu0 0.0
      %733 = vmatpush1.xpose.msra.mxu0 0.0
      %734 = vmatprep.subr.mxu0 0.0
      %735 = vmatpush1.xpose.msra.mxu0 0.0
      %736 = vmatprep.subr.mxu0 0.0
      %737 = vmatpush1.xpose.msra.mxu0 0.0
      %738 = vmatprep.subr.mxu0 0.0
      %739 = vmatpush1.xpose.msra.mxu0 0.0
      %740 = vmatprep.subr.mxu0 0.0
      %741 = vmatpush1.xpose.msra.mxu0 0.0
      %742 = vmatprep.subr.mxu0 0.0
      %743 = vmatpush1.xpose.msra.mxu0 0.0
      %744 = vmatprep.subr.mxu0 0.0
      %745 = vmatpush1.xpose.msra.mxu0 0.0
      %746 = vmatprep.subr.mxu0 0.0
      %747 = vmatpush1.xpose.msra.mxu0 0.0
      %748 = vmatprep.subr.mxu0 0.0
      %749 = vmatpush1.xpose.msra.mxu0 0.0
      %750 = vmatprep.subr.mxu0 0.0
      %751 = vmatpush1.xpose.msra.mxu0 0.0
      %752 = vmatprep.subr.mxu0 0.0
      %753 = vmatpush1.xpose.msra.mxu0 0.0
      %754 = vmatprep.subr.mxu0 0.0
      %755 = vmatpush1.xpose.msra.mxu0 0.0
      %756 = vmatprep.subr.mxu0 0.0
      %757 = vmatpush1.xpose.msra.mxu0 0.0
      %758 = vmatprep.subr.mxu0 0.0
      %759 = vmatpush1.xpose.msra.mxu0 0.0
      %760 = vmatprep.subr.mxu0 0.0
      %761 = vmatpush1.xpose.msra.mxu0 0.0
      %762 = vmatprep.subr.mxu0 0.0
      %763 = vmatpush1.xpose.msra.mxu0 0.0
      %764 = vmatprep.subr.mxu0 0.0
      %765 = vmatpush1.xpose.msra.mxu0 0.0
      %766 = vmatprep.subr.mxu0 0.0
      %767 = vmatpush1.xpose.msra.mxu0 0.0
      %768 = vmatprep.subr.mxu0 0.0
      %769 = vmatpush1.xpose.msra.mxu0 0.0
      %770 = vmatprep.mubr.f32.mxu0 0.0
      %771 = vmatmul.mubr.f32.gmra.mrb[0].mxu0 %v695
      %v772 = vpop.f32.mrb[0].mxu0
      %v773 = vadd.f32 0.0, %v772
      %v774 = vpop.f32.mrb[0].mxu0
      %775 = vmatprep.mubr.f32.mxu0 0.0
      %776 = vmatmul.mubr.f32.gmra.mrb[0].mxu0 %v698
      %v777 = vpop.f32.mrb[0].mxu0
      %v778 = vadd.f32 0.0, %v777
      %v779 = vpop.f32.mrb[0].mxu0
      %780 = vmatprep.mubr.f32.mxu0 0.0
      %781 = vmatmul.mubr.f32.gmra.mrb[0].mxu0 %v701
      %v782 = vpop.f32.mrb[0].mxu0
      %v783 = vadd.f32 0.0, %v782
      %v784 = vpop.f32.mrb[0].mxu0
      %785 = vmatprep.mubr.f32.mxu0 0.0
      %786 = vmatmul.mubr.f32.gmra.mrb[0].mxu0 %v704
      %v787 = vpop.f32.mrb[0].mxu0
      %v788 = vadd.f32 0.0, %v787
      %v789 = vpop.f32.mrb[0].mxu0
      %790 = vdwg.mxu0
      %791 = vst.msk [vmem:[%s231] sm:$0xff] %vm588, %v232
      %792 = vst.msk [vmem:[%s231 + $0x8] sm:$0xff] %vm588, %v233
      %793 = vst.msk [vmem:[%s231 + $0x10] sm:$0xff] %vm588, %v234
      %794 = vst.msk [vmem:[%s231 + $0x18] sm:$0xff] %vm588, %v235
      %795 = vst.msk [vmem:[%s231 + $0x20] sm:$0xff] %vm588, %v570
      %796 = vst.msk [vmem:[%s231 + $0x28] sm:$0xff] %vm588, %v575
      %797 = vst.msk [vmem:[%s231 + $0x30] sm:$0xff] %vm588, %v580
      %798 = vst.msk [vmem:[%s231 + $0x38] sm:$0xff] %vm588, %v585
      %v799 = vmul.f32 %v232, %v570
      %v800 = vmul.f32 %v233, %v575
      %v801 = vmul.f32 %v234, %v580
      %v802 = vmul.f32 %v235, %v585
      %803 = vst.msk [vmem:[%s231 + $0x40] sm:$0xff] %vm588, %v799
      %804 = vst.msk [vmem:[%s231 + $0x48] sm:$0xff] %vm588, %v800
      %805 = vst.msk [vmem:[%s231 + $0x50] sm:$0xff] %vm588, %v801
      %806 = vst.msk [vmem:[%s231 + $0x58] sm:$0xff] %vm588, %v802
      %v807 = vmul.f32 %v232, %v773
      %v808 = vmul.f32 %v233, %v778
      %v809 = vmul.f32 %v234, %v783
      %v810 = vmul.f32 %v235, %v788
      %811 = vst.msk [vmem:[%s231 + $0x60] sm:$0xff] %vm588, %v807
      %812 = vst.msk [vmem:[%s231 + $0x68] sm:$0xff] %vm588, %v808
      %813 = vst.msk [vmem:[%s231 + $0x70] sm:$0xff] %vm588, %v809
      %814 = vst.msk [vmem:[%s231 + $0x78] sm:$0xff] %vm588, %v810
      %p815 = scmp.lt.s32.totalorder %s15, 1
      %s816 = scalar_select %p815, %s15, 1
      %s817 = smul.addr %s816, 16
      %s818 = smul.addr %s817, 8
      %s819 = scalar_lea.vmem %s4, %s818
      // Predicated region
      $region37: #{tpu_custom_call.1} parent=35 // pred_check
        %p820 = pneg %p132
      $region38: #{tpu_custom_call.1} parent=35 // pred_check_branch
        %822 = sbr.rel (%p820) target = $region40
      $region39: #{tpu_custom_call.1} parent=35 // pred_region
        _
      $region40: #{tpu_custom_call.1} parent=35 // pred_fallthru
        _
    $region36: #{tpu_custom_call.1} parent=5 // pred_fallthru
      _
    %p823 = scmp.le.s32.totalorder 2, %s10
    // Predicated region
    $region41: #{tpu_custom_call.1} parent=5 // pred_check
      %p824 = pneg %p823
    $region42: #{tpu_custom_call.1} parent=5 // pred_check_branch
      %826 = sbr.rel (%p824) target = $region44
    $region43: #{tpu_custom_call.1} parent=5 // pred_region
      %s827 = ssub.s32 %s10, 2
      // Predicated region
      $region45: #{tpu_custom_call.1} parent=43 // pred_check
        %p828 = pneg %p138
      $region46: #{tpu_custom_call.1} parent=43 // pred_check_branch
        %830 = sbr.rel (%p828) target = $region48
      $region47: #{tpu_custom_call.1} parent=43 // pred_region
        %p831 = scmp.lt.s32.totalorder %s16, 1
        %s832 = scalar_select %p831, %s16, 1
        %s833 = smul.addr %s832, 16
        %s834 = smul.addr %s833, 8
        %s835 = scalar_lea.vmem %s4, %s834
      $region48: #{tpu_custom_call.1} parent=43 // pred_fallthru
        _
    $region44: #{tpu_custom_call.1} parent=5 // pred_fallthru
      _
  $region6: #{tpu_custom_call.1} parent=0 // loop_footer
    %s14 = sadd.s32 1, %s10
  $region7: #{tpu_custom_call.1} parent=0 // loop_footer_branch
    %9 = sbr.rel target = $region3
  $region8: #{tpu_custom_call.1} parent=0 // loop_exit
    _

</llo_original>
